<compile_context>
chip_gen: v7x
topology: tpu7x:2x2x1
jax: 0.10.0
libtpu: 0.0.40
codegen_flags: <defaults>
</compile_context>

<pallas_src>
import jax
import jax.numpy as jnp
from jax.experimental import pallas as pl
from jax.experimental.pallas import tpu as pltpu

_LANE = 128


def _round_up(x, m):
    return (x + m - 1) // m * m


def _vmem_ceiling_bytes():
    """~75% of the physical per-core VMEM, never below the 32 MiB scoped default.

    v5e/v6e (128 MiB) -> ~96 MiB; v7x (64 MiB/TC) -> ~48 MiB.  Falls back to a
    conservative 64 MiB assumption (-> 48 MiB ceiling) if the query fails.
    """
    cap = 64 << 20
    try:
        info = pltpu.get_tpu_info()
        c = getattr(info, "vmem_capacity_bytes", None)
        if c:
            cap = int(c)
    except Exception:
        pass
    return max(32 << 20, (cap * 3) // 4)


# ----------------------------- kernels ------------------------------------ #

def _mlp_kernel_single(x_ref, w1t_ref, w2t_ref, o_ref):
    # Single H-chunk: no accumulator needed, write fc2 result directly.
    h = jnp.dot(x_ref[...], w1t_ref[...], preferred_element_type=jnp.float32)
    h = jnp.maximum(h, 0.0)                       # ReLU on the VPU; drop(p=0) is identity
    o_ref[...] = jnp.dot(h.astype(w2t_ref.dtype), w2t_ref[...],
                         preferred_element_type=jnp.float32).astype(o_ref.dtype)


def _mlp_kernel_acc_inplace(x_ref, w1t_ref, w2t_ref, o_ref):
    # Multi H-chunk, f32 output: o_ref is resident across k -> accumulate in place.
    k = pl.program_id(1)

    @pl.when(k == 0)
    def _():
        o_ref[...] = jnp.zeros_like(o_ref)

    h = jnp.maximum(
        jnp.dot(x_ref[...], w1t_ref[...], preferred_element_type=jnp.float32), 0.0)
    o_ref[...] += jnp.dot(h.astype(w2t_ref.dtype), w2t_ref[...],
                          preferred_element_type=jnp.float32)


def _mlp_kernel_acc_scratch(x_ref, w1t_ref, w2t_ref, o_ref, acc_ref):
    # Multi H-chunk, non-f32 output: f32 scratch accumulator, cast on last step.
    k = pl.program_id(1)

    @pl.when(k == 0)
    def _():
        acc_ref[...] = jnp.zeros_like(acc_ref)

    h = jnp.maximum(
        jnp.dot(x_ref[...], w1t_ref[...], preferred_element_type=jnp.float32), 0.0)
    acc_ref[...] += jnp.dot(h.astype(w2t_ref.dtype), w2t_ref[...],
                            preferred_element_type=jnp.float32)

    @pl.when(k == pl.num_programs(1) - 1)
    def _():
        o_ref[...] = acc_ref[...].astype(o_ref.dtype)


# ----------------------------- wrapper ------------------------------------ #

def prepare_mlp_weights(w1, w2, compute_dtype=None):
    """Transpose + lane-pad the PyTorch-layout weights.

    Call this ONCE at parameter-load time (outside the jitted step) so the
    per-call path pays no HBM transpose/pad traffic.

    w1: (H, D)  fc1.weight (out, in);  w2: (O, H)  fc2.weight (out, in).
    Returns (w1t_pad (Dp,Hp), w2t_pad (Hp,Op), (D, H, O)).
    """
    H, D = w1.shape
    O, H2 = w2.shape
    assert H2 == H
    if compute_dtype is not None:
        w1 = w1.astype(compute_dtype)
        w2 = w2.astype(compute_dtype)
    Dp, Hp, Op = (_round_up(d, _LANE) for d in (D, H, O))
    w1t = jnp.pad(w1.T, ((0, Dp - D), (0, Hp - H)))
    w2t = jnp.pad(w2.T, ((0, Hp - H), (0, Op - O)))
    return w1t, w2t, (D, H, O)


def mlp_pallas(x, w1t, w2t, dims, *, tile_m=None, tile_h=None):
    """Fused MLP forward.  x: (..., D); w1t/w2t from prepare_mlp_weights."""
    D, H, O = dims
    Dp, Hp = w1t.shape
    Hp2, Op = w2t.shape
    assert Hp2 == Hp
    orig_shape = x.shape
    assert orig_shape[-1] == D

    out_dtype = x.dtype
    if x.dtype != w1t.dtype:
        x = x.astype(w1t.dtype)

    x2 = x.reshape(-1, D)
    M = x2.shape[0]
    if Dp != D:
        x2 = jnp.pad(x2, ((0, 0), (0, Dp - D)))

    itemsize = jnp.dtype(x2.dtype).itemsize
    sub = max(8, 32 // itemsize)  # sublane multiple: 8 for f32, 16 for bf16

    # --- hidden tiling: keep the f32 fc1 intermediate small (<=256 wide) ---
    if tile_h is None:
        if Hp <= 256:
            tile_h = Hp
        elif Hp % 256 == 0:
            tile_h = 256
        else:
            tile_h = 128  # always divides the 128-padded Hp
    assert Hp % tile_h == 0, "tile_h must divide padded H"
    num_k = Hp // tile_h

    # --- row tiling: primary arithmetic-intensity lever ---
    if tile_m is None:
        tile_m = min(512, _round_up(max(M, 1), sub))
    tile_m = _round_up(tile_m, sub)

    use_scratch = (num_k > 1) and (jnp.dtype(out_dtype) != jnp.float32)

    def footprint(tm):
        f = itemsize * (2 * tm * Dp + 2 * Dp * tile_h + 2 * tile_h * Op
                        + 2 * tm * Op)
        f += 4 * tm * tile_h                 # f32 fc1 intermediate
        if use_scratch:
            f += 4 * tm * Op                 # f32 accumulator scratch
        return f

    vmem_ceiling = _vmem_ceiling_bytes()
    while footprint(tile_m) > vmem_ceiling and tile_m > sub:
        tile_m = max(sub, _round_up(tile_m // 2, sub))

    M_pad = _round_up(max(M, 1), tile_m)
    if M_pad != M:
        x2 = jnp.pad(x2, ((0, M_pad - M), (0, 0)))

    n_row_tiles = M_pad // tile_m
    grid = (n_row_tiles, num_k)

    vmem_limit = int(min(max(int(footprint(tile_m) * 1.25), 4 << 20), vmem_ceiling))

    cost = pl.CostEstimate(
        flops=2 * M_pad * (Dp * Hp + Hp * Op),
        transcendentals=0,
        # activations read/written once + weights restreamed once per row tile.
        bytes_accessed=(M_pad * Dp + M_pad * Op) * itemsize
        + n_row_tiles * (Dp * Hp + Hp * Op) * itemsize,
    )

    if num_k == 1:
        kernel = _mlp_kernel_single
        scratch = []
    elif jnp.dtype(out_dtype) == jnp.float32:
        kernel = _mlp_kernel_acc_inplace
        scratch = []
    else:
        kernel = _mlp_kernel_acc_scratch
        scratch = [pltpu.VMEM((tile_m, Op), jnp.float32)]

    out = pl.pallas_call(
        kernel,
        out_shape=jax.ShapeDtypeStruct((M_pad, Op), out_dtype),
        grid=grid,
        in_specs=[
            pl.BlockSpec((tile_m, Dp), lambda i, k: (i, 0)),   # x row tile
            pl.BlockSpec((Dp, tile_h), lambda i, k: (0, k)),   # fc1^T H-chunk
            pl.BlockSpec((tile_h, Op), lambda i, k: (k, 0)),   # fc2^T H-chunk
        ],
        out_specs=pl.BlockSpec((tile_m, Op), lambda i, k: (i, 0)),
        scratch_shapes=scratch,
        compiler_params=pltpu.CompilerParams(
            dimension_semantics=("parallel", "arbitrary"),
            vmem_limit_bytes=vmem_limit,
        ),
        cost_estimate=cost,
    )(x2, w1t, w2t)

    out = out[:M, :O]
    return out.reshape(*orig_shape[:-1], O)


def mlp_forward(x, w1, w2, **kw):
    """Convenience path: prepares (transposes + pads) PyTorch-layout weights inline.
    Production code should call prepare_mlp_weights once at load time."""
    w1t, w2t, dims = prepare_mlp_weights(w1, w2)
    return mlp_pallas(x, w1t, w2t, dims, **kw)


if __name__ == "__main__":
    # Module config: in_features=32, hidden_features=64, out_features=32, bias=False
    B, N = 2, 8
    in_features, hidden_features, out_features = 32, 64, 32

    key = jax.random.PRNGKey(0)
    kx, k1, k2 = jax.random.split(key, 3)

    x = jax.random.normal(kx, (B, N, in_features), dtype=jnp.float32)
    # PyTorch nn.Linear weight layout: (out_features, in_features)
    w1 = jax.random.normal(k1, (hidden_features, in_features), jnp.float32) / jnp.sqrt(in_features)
    w2 = jax.random.normal(k2, (out_features, hidden_features), jnp.float32) / jnp.sqrt(hidden_features)

    # Weights prepared once (transpose + lane-pad), then the fused kernel.
    w1t, w2t, dims = prepare_mlp_weights(w1, w2)
    y = jax.block_until_ready(mlp_pallas(x, w1t, w2t, dims))
    y_ref = jnp.maximum(x @ w1.T, 0.0) @ w2.T
    assert y.shape == (B, N, out_features)
    assert jnp.allclose(y, y_ref, atol=1e-5, rtol=1e-5)

    # Check 2: larger shapes exercising the multi-step grid — multiple row tiles
    # ("parallel") x 2 H-chunks ("arbitrary", f32 in-place accumulation).
    kx2, k3, k4 = jax.random.split(jax.random.PRNGKey(1), 3)
    Bb, Nb, Db, Hb, Ob = 2, 512, 128, 256, 128
    xb = jax.random.normal(kx2, (Bb, Nb, Db), jnp.float32)
    w1b = jax.random.normal(k3, (Hb, Db), jnp.float32) / jnp.sqrt(Db)
    w2b = jax.random.normal(k4, (Ob, Hb), jnp.float32) / jnp.sqrt(Hb)
    w1bt, w2bt, dimsb = prepare_mlp_weights(w1b, w2b)
    yb = jax.block_until_ready(mlp_pallas(xb, w1bt, w2bt, dimsb, tile_m=256, tile_h=128))
    yb_ref = jnp.maximum(xb @ w1b.T, 0.0) @ w2b.T
    assert yb.shape == (Bb, Nb, Ob)
    assert jnp.allclose(yb, yb_ref, atol=2e-4, rtol=2e-4)

    # Check 3: bf16 compute (f32 accumulation) exercising the scratch-accumulator
    # kernel (num_k > 1, non-f32 output dtype).
    kx3, k5, k6 = jax.random.split(jax.random.PRNGKey(2), 3)
    Bc, Nc, Dc, Hc, Oc = 2, 64, 128, 256, 128
    xc = jax.random.normal(kx3, (Bc, Nc, Dc), jnp.float32).astype(jnp.bfloat16)
    w1c = (jax.random.normal(k5, (Hc, Dc), jnp.float32) / jnp.sqrt(Dc))
    w2c = (jax.random.normal(k6, (Oc, Hc), jnp.float32) / jnp.sqrt(Hc))
    w1ct, w2ct, dimsc = prepare_mlp_weights(w1c, w2c, compute_dtype=jnp.bfloat16)
    yc = jax.block_until_ready(mlp_pallas(xc, w1ct, w2ct, dimsc, tile_h=128))
    xc_f = xc.astype(jnp.float32)
    yc_ref = jnp.maximum(xc_f @ w1c.T.astype(jnp.float32).T.T, 0.0)  # placeholder, recompute below
    yc_ref = jnp.maximum(xc_f @ w1c.astype(jnp.bfloat16).astype(jnp.float32).T, 0.0) \
        @ w2c.astype(jnp.bfloat16).astype(jnp.float32).T
    assert yc.shape == (Bc, Nc, Oc)
    assert jnp.allclose(yc.astype(jnp.float32), yc_ref, atol=8e-2, rtol=8e-2)

    print("KERNEL_OK")
</pallas_src>

<mosaic_0001>
module attributes {stable_mosaic.version = 11 : i64} {
  func.func @_mlp_kernel_single(%arg0: i32, %arg1: i32, %arg2: memref<16x128xf32, #tpu.memory_space<vmem>>, %arg3: memref<128x128xf32, #tpu.memory_space<vmem>>, %arg4: memref<128x128xf32, #tpu.memory_space<vmem>>, %arg5: memref<16x128xf32, #tpu.memory_space<vmem>>) attributes {dimension_semantics = [#tpu.dimension_semantics<parallel>, #tpu.dimension_semantics<arbitrary>], iteration_bounds = array<i64: 1, 1>, scalar_prefetch = 0 : i64, scratch_operands = 0 : i64, tpu.core_type = #tpu.core_type<tc>, window_params = [{transform_indices = @transform_0, window_bounds = array<i64: 16, 128>}, {transform_indices = @transform_1, window_bounds = array<i64: 128, 128>}, {transform_indices = @transform_2, window_bounds = array<i64: 128, 128>}, {transform_indices = @transform_3, window_bounds = array<i64: 16, 128>}]} {
    %c0 = arith.constant 0 : index
    %c0_0 = arith.constant 0 : index
    %0 = vector.load %arg2[%c0, %c0_0] : memref<16x128xf32, #tpu.memory_space<vmem>>, vector<16x128xf32>
    %c0_1 = arith.constant 0 : index
    %c0_2 = arith.constant 0 : index
    %1 = vector.load %arg3[%c0_1, %c0_2] : memref<128x128xf32, #tpu.memory_space<vmem>>, vector<128x128xf32>
    %cst = arith.constant dense<0.000000e+00> : vector<16x128xf32>
    %2 = tpu.matmul %0, %1, %cst {dimension_numbers = #tpu.dot_dimension_numbers<[1], [0], [0], [1], [0, 0, 1, 1], [], []>} : vector<16x128xf32>, vector<128x128xf32>, vector<16x128xf32> -> vector<16x128xf32>
    %cst_3 = arith.constant 0.000000e+00 : f32
    %3 = vector.broadcast %cst_3 : f32 to vector<16x128xf32>
    %4 = arith.maximumf %2, %3 : vector<16x128xf32>
    %c0_4 = arith.constant 0 : index
    %c0_5 = arith.constant 0 : index
    %5 = vector.load %arg4[%c0_4, %c0_5] : memref<128x128xf32, #tpu.memory_space<vmem>>, vector<128x128xf32>
    %cst_6 = arith.constant dense<0.000000e+00> : vector<16x128xf32>
    %6 = tpu.matmul %4, %5, %cst_6 {dimension_numbers = #tpu.dot_dimension_numbers<[1], [0], [0], [1], [0, 0, 1, 1], [], []>} : vector<16x128xf32>, vector<128x128xf32>, vector<16x128xf32> -> vector<16x128xf32>
    %c0_7 = arith.constant 0 : index
    %c0_8 = arith.constant 0 : index
    %7 = vector.load %arg5[%c0_7, %c0_8] : memref<16x128xf32, #tpu.memory_space<vmem>>, vector<16x128xf32>
    tpu.vector_store %arg5[%c0_7, %c0_8], %6 {strides = array<i32>} : memref<16x128xf32, #tpu.memory_space<vmem>>, vector<16x128xf32>,
    return
  }
  func.func @transform_0(%arg0: i32, %arg1: i32) -> (i32, i32) {
    %c0_i32 = arith.constant 0 : i32
    %c0_i32_0 = arith.constant 0 : i32
    return %arg0, %c0_i32 : i32, i32
  }
  func.func @transform_1(%arg0: i32, %arg1: i32) -> (i32, i32) {
    %c0_i32 = arith.constant 0 : i32
    %c0_i32_0 = arith.constant 0 : i32
    return %c0_i32, %arg1 : i32, i32
  }
  func.func @transform_2(%arg0: i32, %arg1: i32) -> (i32, i32) {
    %c0_i32 = arith.constant 0 : i32
    %c0_i32_0 = arith.constant 0 : i32
    return %arg1, %c0_i32 : i32, i32
  }
  func.func @transform_3(%arg0: i32, %arg1: i32) -> (i32, i32) {
    %c0_i32 = arith.constant 0 : i32
    %c0_i32_0 = arith.constant 0 : i32
    return %arg0, %c0_i32 : i32, i32
  }
}

</mosaic_0001>

<llo_original>
// kernel: tpu_custom_call.1
$region0: #{tpu_custom_call.1}
  #allocation0 [shape = 'u32[]', space=smem, size = 0x4, offset = 0x4, fixed_abs, tag = 'smem constant byte address 0x4 - core index']
  #allocation1 [shape = 'u32[144,128]{1,0:T(1,128)}', space=vmem, size = 0x12000, scoped, tag = 'internal scratch']
  %s0 = inlined_call_operand.hbm [shape: f32[16,128], index: 0, kind: input, shape index: {}]
  %s1 = inlined_call_operand.hbm [shape: f32[128,128], index: 1, kind: input, shape index: {}]
  %s2 = inlined_call_operand.hbm [shape: f32[128,128], index: 2, kind: input, shape index: {}]
  %s3 = inlined_call_operand.hbm [shape: f32[16,128], index: 3, kind: output, shape index: {}]
  %s4 = sld [smem:[#allocation0]]
  $region34: #{tpu_custom_call.1} parent=0
    _
  %s6 = ssub.s32 1, %s4
  %s7 = scalar_select 0, %s6, %s4
  $region1: #{tpu_custom_call.1} parent=0
    #allocation2 [shape = 'u8[8192]{0}', space=vmem, size = 0x2000, scoped, tag = 'input window, operand 0, single buffered']
    #allocation3 [shape = 's32[1]{0}', space=sflag, size = 0x4, scoped, tag = 'scoped memory for tpu_custom_call.1']
    #allocation4 [shape = 's32[1]{0}', space=sflag, size = 0x4, scoped, tag = 'scoped memory for tpu_custom_call.1']
    #allocation5 [shape = 'u8[65536]{0}', space=vmem, size = 0x10000, scoped, tag = 'input window, operand 1, single buffered']
    #allocation6 [shape = 's32[1]{0}', space=sflag, size = 0x4, scoped, tag = 'scoped memory for tpu_custom_call.1']
    #allocation7 [shape = 'u8[65536]{0}', space=vmem, size = 0x10000, scoped, tag = 'input window, operand 2, single buffered']
    #allocation8 [shape = 'u8[8192]{0}', space=vmem, size = 0x2000, scoped, tag = 'output window, operand 0, single buffered']
    %8 = vsyncpa [#allocation3], 0
    %9 = vsyncpa [#allocation6], 0
    %10 = vsyncpa [#allocation4], 0
    // Predicated region
    $region2: #{tpu_custom_call.1} parent=1 // pred_check
      _
    $region3: #{tpu_custom_call.1} parent=1 // pred_check_branch
      %12 = sbr.rel (0) target = $region5
    $region4: #{tpu_custom_call.1} parent=1 // pred_region
      %s14 = ssub.s32 256, 256
      %15 = vsyncadd [#allocation3], %s14
      %s16 = sshll.u32 [#allocation2], 4
      %s17 = int_to_ptr.vmem [resolvable:$true] %s16
      %22 = dma.hbm_to_vmem [thread:$0]  %s0, 256, %s17, [#allocation3], 128, 128, 8
    $region5: #{tpu_custom_call.1} parent=1 // pred_fallthru
      _
    // Predicated region
    $region6: #{tpu_custom_call.1} parent=1 // pred_check
      _
    $region7: #{tpu_custom_call.1} parent=1 // pred_check_branch
      %24 = sbr.rel (0) target = $region9
    $region8: #{tpu_custom_call.1} parent=1 // pred_region
      %s26 = ssub.s32 2048, 2048
      %27 = vsyncadd [#allocation6], %s26
      %s28 = sshll.u32 [#allocation5], 4
      %s29 = int_to_ptr.vmem [resolvable:$true] %s28
      %34 = dma.hbm_to_vmem [thread:$0]  %s1, 2048, %s29, [#allocation6], 128, 128, 8
    $region9: #{tpu_custom_call.1} parent=1 // pred_fallthru
      _
    // Predicated region
    $region10: #{tpu_custom_call.1} parent=1 // pred_check
      _
    $region11: #{tpu_custom_call.1} parent=1 // pred_check_branch
      %36 = sbr.rel (0) target = $region13
    $region12: #{tpu_custom_call.1} parent=1 // pred_region
      %s38 = ssub.s32 2048, 2048
      %39 = vsyncadd [#allocation6], %s38
      %s40 = sshll.u32 [#allocation7], 4
      %s41 = int_to_ptr.vmem [resolvable:$true] %s40
      %46 = dma.hbm_to_vmem [thread:$0]  %s2, 2048, %s41, [#allocation6], 128, 128, 8
    $region13: #{tpu_custom_call.1} parent=1 // pred_fallthru
      _
    // Predicated region
    $region14: #{tpu_custom_call.1} parent=1 // pred_check
      _
    $region15: #{tpu_custom_call.1} parent=1 // pred_check_branch
      %48 = sbr.rel (0) target = $region17
    $region16: #{tpu_custom_call.1} parent=1 // pred_region
      %49 = dma.done [#allocation3], 256
    $region17: #{tpu_custom_call.1} parent=1 // pred_fallthru
      _
    // Predicated region
    $region18: #{tpu_custom_call.1} parent=1 // pred_check
      _
    $region19: #{tpu_custom_call.1} parent=1 // pred_check_branch
      %51 = sbr.rel (0) target = $region21
    $region20: #{tpu_custom_call.1} parent=1 // pred_region
      %52 = dma.done [#allocation6], 2048
    $region21: #{tpu_custom_call.1} parent=1 // pred_fallthru
      _
    // Predicated region
    $region22: #{tpu_custom_call.1} parent=1 // pred_check
      _
    $region23: #{tpu_custom_call.1} parent=1 // pred_check_branch
      %54 = sbr.rel (0) target = $region25
    $region24: #{tpu_custom_call.1} parent=1 // pred_region
      %55 = dma.done [#allocation6], 2048
    $region25: #{tpu_custom_call.1} parent=1 // pred_fallthru
      _
    %v56 = vld [vmem:[#allocation2] sm:$0xff]
    %v57 = vld [vmem:[#allocation2 + $0x8] sm:$0xff]
    %v58 = vld [vmem:[#allocation5] sm:$0xff]
    %v59 = vld [vmem:[#allocation5 + $0x8] sm:$0xff]
    %v60 = vld [vmem:[#allocation5 + $0x10] sm:$0xff]
    %v61 = vld [vmem:[#allocation5 + $0x18] sm:$0xff]
    %v62 = vld [vmem:[#allocation5 + $0x20] sm:$0xff]
    %v63 = vld [vmem:[#allocation5 + $0x28] sm:$0xff]
    %v64 = vld [vmem:[#allocation5 + $0x30] sm:$0xff]
    %v65 = vld [vmem:[#allocation5 + $0x38] sm:$0xff]
    %v66 = vld [vmem:[#allocation5 + $0x40] sm:$0xff]
    %v67 = vld [vmem:[#allocation5 + $0x48] sm:$0xff]
    %v68 = vld [vmem:[#allocation5 + $0x50] sm:$0xff]
    %v69 = vld [vmem:[#allocation5 + $0x58] sm:$0xff]
    %v70 = vld [vmem:[#allocation5 + $0x60] sm:$0xff]
    %v71 = vld [vmem:[#allocation5 + $0x68] sm:$0xff]
    %v72 = vld [vmem:[#allocation5 + $0x70] sm:$0xff]
    %v73 = vld [vmem:[#allocation5 + $0x78] sm:$0xff]
    %74 = vmatprep.subr.mxu0 0.0
    %75 = vmatpush1.msra.mxu0 %v58
    %76 = vmatprep.subr.mxu0 0.0
    %77 = vmatpush1.msra.mxu0 %v59
    %78 = vmatprep.subr.mxu0 0.0
    %79 = vmatpush1.msra.mxu0 %v60
    %80 = vmatprep.subr.mxu0 0.0
    %81 = vmatpush1.msra.mxu0 %v61
    %82 = vmatprep.subr.mxu0 0.0
    %83 = vmatpush1.msra.mxu0 %v62
    %84 = vmatprep.subr.mxu0 0.0
    %85 = vmatpush1.msra.mxu0 %v63
    %86 = vmatprep.subr.mxu0 0.0
    %87 = vmatpush1.msra.mxu0 %v64
    %88 = vmatprep.subr.mxu0 0.0
    %89 = vmatpush1.msra.mxu0 %v65
    %90 = vmatprep.subr.mxu0 0.0
    %91 = vmatpush1.msra.mxu0 %v66
    %92 = vmatprep.subr.mxu0 0.0
    %93 = vmatpush1.msra.mxu0 %v67
    %94 = vmatprep.subr.mxu0 0.0
    %95 = vmatpush1.msra.mxu0 %v68
    %96 = vmatprep.subr.mxu0 0.0
    %97 = vmatpush1.msra.mxu0 %v69
    %98 = vmatprep.subr.mxu0 0.0
    %99 = vmatpush1.msra.mxu0 %v70
    %100 = vmatprep.subr.mxu0 0.0
    %101 = vmatpush1.msra.mxu0 %v71
    %102 = vmatprep.subr.mxu0 0.0
    %103 = vmatpush1.msra.mxu0 %v72
    %104 = vmatprep.subr.mxu0 0.0
    %105 = vmatpush1.msra.mxu0 %v73
    %106 = vmatprep.subr.mxu0 0.0
    %107 = vmatpush1.msra.mxu0 0.0
    %108 = vmatprep.subr.mxu0 0.0
    %109 = vmatpush1.msra.mxu0 0.0
    %110 = vmatprep.subr.mxu0 0.0
    %111 = vmatpush1.msra.mxu0 0.0
    %112 = vmatprep.subr.mxu0 0.0
    %113 = vmatpush1.msra.mxu0 0.0
    %114 = vmatprep.subr.mxu0 0.0
    %115 = vmatpush1.msra.mxu0 0.0
    %116 = vmatprep.subr.mxu0 0.0
    %117 = vmatpush1.msra.mxu0 0.0
    %118 = vmatprep.subr.mxu0 0.0
    %119 = vmatpush1.msra.mxu0 0.0
    %120 = vmatprep.subr.mxu0 0.0
    %121 = vmatpush1.msra.mxu0 0.0
    %122 = vmatprep.subr.mxu0 0.0
    %123 = vmatpush1.msra.mxu0 0.0
    %124 = vmatprep.subr.mxu0 0.0
    %125 = vmatpush1.msra.mxu0 0.0
    %126 = vmatprep.subr.mxu0 0.0
    %127 = vmatpush1.msra.mxu0 0.0
    %128 = vmatprep.subr.mxu0 0.0
    %129 = vmatpush1.msra.mxu0 0.0
    %130 = vmatprep.subr.mxu0 0.0
    %131 = vmatpush1.msra.mxu0 0.0
    %132 = vmatprep.subr.mxu0 0.0
    %133 = vmatpush1.msra.mxu0 0.0
    %134 = vmatprep.subr.mxu0 0.0
    %135 = vmatpush1.msra.mxu0 0.0
    %136 = vmatprep.subr.mxu0 0.0
    %137 = vmatpush1.msra.mxu0 0.0
    %138 = vmatprep.mubr.f32.mxu0 0.0
    %139 = vmatmul.mubr.f32.gmra.mrb[0].mxu0 %v56
    %v140 = vpop.f32.mrb[0].mxu0
    %v141 = vadd.f32 0.0, %v140
    %v142 = vpop.f32.mrb[0].mxu0
    %143 = vmatprep.mubr.f32.mxu0 0.0
    %144 = vmatmul.mubr.f32.gmra.mrb[0].mxu0 %v57
    %v145 = vpop.f32.mrb[0].mxu0
    %v146 = vadd.f32 0.0, %v145
    %v147 = vpop.f32.mrb[0].mxu0
    %148 = vdwg.mxu0
    %v149 = vmax.f32 %v141, 0.0
    %v150 = vmax.f32 %v146, 0.0
    %v151 = vld [vmem:[#allocation7] sm:$0xff]
    %v152 = vld [vmem:[#allocation7 + $0x8] sm:$0xff]
    %v153 = vld [vmem:[#allocation7 + $0x10] sm:$0xff]
    %v154 = vld [vmem:[#allocation7 + $0x18] sm:$0xff]
    %v155 = vld [vmem:[#allocation7 + $0x20] sm:$0xff]
    %v156 = vld [vmem:[#allocation7 + $0x28] sm:$0xff]
    %v157 = vld [vmem:[#allocation7 + $0x30] sm:$0xff]
    %v158 = vld [vmem:[#allocation7 + $0x38] sm:$0xff]
    %v159 = vld [vmem:[#allocation7 + $0x40] sm:$0xff]
    %v160 = vld [vmem:[#allocation7 + $0x48] sm:$0xff]
    %v161 = vld [vmem:[#allocation7 + $0x50] sm:$0xff]
    %v162 = vld [vmem:[#allocation7 + $0x58] sm:$0xff]
    %v163 = vld [vmem:[#allocation7 + $0x60] sm:$0xff]
    %v164 = vld [vmem:[#allocation7 + $0x68] sm:$0xff]
    %v165 = vld [vmem:[#allocation7 + $0x70] sm:$0xff]
    %v166 = vld [vmem:[#allocation7 + $0x78] sm:$0xff]
    %167 = vmatprep.subr.mxu0 0.0
    %168 = vmatpush1.msra.mxu0 %v151
    %169 = vmatprep.subr.mxu0 0.0
    %170 = vmatpush1.msra.mxu0 %v152
    %171 = vmatprep.subr.mxu0 0.0
    %172 = vmatpush1.msra.mxu0 %v153
    %173 = vmatprep.subr.mxu0 0.0
    %174 = vmatpush1.msra.mxu0 %v154
    %175 = vmatprep.subr.mxu0 0.0
    %176 = vmatpush1.msra.mxu0 %v155
    %177 = vmatprep.subr.mxu0 0.0
    %178 = vmatpush1.msra.mxu0 %v156
    %179 = vmatprep.subr.mxu0 0.0
    %180 = vmatpush1.msra.mxu0 %v157
    %181 = vmatprep.subr.mxu0 0.0
    %182 = vmatpush1.msra.mxu0 %v158
    %183 = vmatprep.subr.mxu0 0.0
    %184 = vmatpush1.msra.mxu0 %v159
    %185 = vmatprep.subr.mxu0 0.0
    %186 = vmatpush1.msra.mxu0 %v160
    %187 = vmatprep.subr.mxu0 0.0
    %188 = vmatpush1.msra.mxu0 %v161
    %189 = vmatprep.subr.mxu0 0.0
    %190 = vmatpush1.msra.mxu0 %v162
    %191 = vmatprep.subr.mxu0 0.0
    %192 = vmatpush1.msra.mxu0 %v163
    %193 = vmatprep.subr.mxu0 0.0
    %194 = vmatpush1.msra.mxu0 %v164
    %195 = vmatprep.subr.mxu0 0.0
    %196 = vmatpush1.msra.mxu0 %v165
    %197 = vmatprep.subr.mxu0 0.0
    %198 = vmatpush1.msra.mxu0 %v166
    %199 = vmatprep.subr.mxu0 0.0
    %200 = vmatpush1.msra.mxu0 0.0
    %201 = vmatprep.subr.mxu0 0.0
    %202 = vmatpush1.msra.mxu0 0.0
    %203 = vmatprep.subr.mxu0 0.0
    %204 = vmatpush1.msra.mxu0 0.0
    %205 = vmatprep.subr.mxu0 0.0
    %206 = vmatpush1.msra.mxu0 0.0
    %207 = vmatprep.subr.mxu0 0.0
    %208 = vmatpush1.msra.mxu0 0.0
    %209 = vmatprep.subr.mxu0 0.0
    %210 = vmatpush1.msra.mxu0 0.0
    %211 = vmatprep.subr.mxu0 0.0
    %212 = vmatpush1.msra.mxu0 0.0
    %213 = vmatprep.subr.mxu0 0.0
    %214 = vmatpush1.msra.mxu0 0.0
    %215 = vmatprep.subr.mxu0 0.0
    %216 = vmatpush1.msra.mxu0 0.0
    %217 = vmatprep.subr.mxu0 0.0
    %218 = vmatpush1.msra.mxu0 0.0
    %219 = vmatprep.subr.mxu0 0.0
    %220 = vmatpush1.msra.mxu0 0.0
    %221 = vmatprep.subr.mxu0 0.0
    %222 = vmatpush1.msra.mxu0 0.0
    %223 = vmatprep.subr.mxu0 0.0
    %224 = vmatpush1.msra.mxu0 0.0
    %225 = vmatprep.subr.mxu0 0.0
    %226 = vmatpush1.msra.mxu0 0.0
    %227 = vmatprep.subr.mxu0 0.0
    %228 = vmatpush1.msra.mxu0 0.0
    %229 = vmatprep.subr.mxu0 0.0
    %230 = vmatpush1.msra.mxu0 0.0
    %231 = vmatprep.mubr.f32.mxu0 0.0
    %232 = vmatmul.mubr.f32.gmra.mrb[0].mxu0 %v149
    %v233 = vpop.f32.mrb[0].mxu0
    %v234 = vadd.f32 0.0, %v233
    %v235 = vpop.f32.mrb[0].mxu0
    %236 = vmatprep.mubr.f32.mxu0 0.0
    %237 = vmatmul.mubr.f32.gmra.mrb[0].mxu0 %v150
    %v238 = vpop.f32.mrb[0].mxu0
    %v239 = vadd.f32 0.0, %v238
    %v240 = vpop.f32.mrb[0].mxu0
    %241 = vdwg.mxu0
    %242 = vst [vmem:[#allocation8] sm:$0xff] %v234
    %243 = vst [vmem:[#allocation8 + $0x8] sm:$0xff] %v239
    // Predicated region
    $region26: #{tpu_custom_call.1} parent=1 // pred_check
      _
    $region27: #{tpu_custom_call.1} parent=1 // pred_check_branch
      %245 = sbr.rel (0) target = $region29
    $region28: #{tpu_custom_call.1} parent=1 // pred_region
      %s247 = ssub.s32 256, 256
      %248 = vsyncadd [#allocation4], %s247
      %s249 = sshll.u32 [#allocation8], 4
      %s250 = int_to_ptr.vmem [resolvable:$true] %s249
      %255 = dma.vmem_to_hbm [thread:$0]  %s250, 256, %s3, [#allocation4], 128, 128, 8
    $region29: #{tpu_custom_call.1} parent=1 // pred_fallthru
      _
    // Predicated region
    $region30: #{tpu_custom_call.1} parent=1 // pred_check
      _
    $region31: #{tpu_custom_call.1} parent=1 // pred_check_branch
      %257 = sbr.rel (0) target = $region33
    $region32: #{tpu_custom_call.1} parent=1 // pred_region
      %258 = dma.done [#allocation4], 256
    $region33: #{tpu_custom_call.1} parent=1 // pred_fallthru
      _
    %259 = vsyncpa [#allocation3], 1
    %260 = vsyncpa [#allocation6], 1
    %261 = vsyncpa [#allocation4], 1

</llo_original>
